<compile_context>
chip_gen: v7x
topology: tpu7x:2x2x1
jax: 0.10.0
libtpu: 0.0.40
codegen_flags: <defaults>
</compile_context>

<pallas_src>
import functools

import jax
import jax.numpy as jnp
from jax.experimental import pallas as pl
from jax.experimental.pallas import tpu as pltpu


def _round_up(x, m):
    return (x + m - 1) // m * m


def _fused_experts_kernel(x_ref, w_ref, b_ref, c0_ref, c1_ref, o_ref):
    """One token tile: single fused (both-expert) linear + gated combine.

    x_ref:  (tm, D_in)         token tile (compute dtype, e.g. bf16)
    w_ref:  (D_in, 2*D_out_p)  expert-0 / expert-1 weights concatenated on lanes
    b_ref:  (1, 2*D_out_p)     concatenated biases (f32)
    c0_ref: (tm, 1)            per-token coefficient for expert 0 (mask*gate, f32)
    c1_ref: (tm, 1)            per-token coefficient for expert 1
    o_ref:  (tm, D_out_p)
    """
    d = o_ref.shape[-1]  # D_out_p, a multiple of 128 -> tile-aligned slices below
    # One MXU pass covering both experts (N = 2*D_out_p), f32 accumulation.
    y = jnp.dot(x_ref[...], w_ref[...], preferred_element_type=jnp.float32)
    y = y + b_ref[...]
    y0 = y[:, :d]
    y1 = y[:, d:]
    # Combine in f32 (VPU); coefficients broadcast along lanes from (tm, 1).
    o_ref[...] = (c0_ref[...] * y0 + c1_ref[...] * y1).astype(o_ref.dtype)


@functools.partial(jax.jit, static_argnames=("tm", "compute_dtype"))
def fused_experts_forward(hidden_states, masks_se, gates, weight, bias,
                          *, tm=256, compute_dtype=None):
    """Forward pass of FusedExperts (top-2 over 2 local experts).

    hidden_states: (..., D_in)
    masks_se:      tuple of 2 arrays, each (..., 2)   (one-hot expert masks)
    gates:         tuple of 2 arrays, each (...,)     (top-1 / top-2 gate values)
    weight:        (2, D_out, D_in)  torch nn.Linear layout per expert
    bias:          (2, D_out)
    compute_dtype: dtype for the matmul operands (e.g. jnp.bfloat16 on TPU MXUs);
                   None -> use hidden_states.dtype. Accumulate/combine stay f32.
    """
    cdt = (jnp.dtype(compute_dtype) if compute_dtype is not None
           else jnp.dtype(hidden_states.dtype))
    # Sublane packing: f32 -> 8, bf16/f16 -> 16, int8/fp8 -> 32.
    sub = 32 if cdt.itemsize == 1 else (16 if cdt.itemsize == 2 else 8)

    lead_shape = hidden_states.shape[:-1]
    n_experts, d_out, d_in = weight.shape
    assert n_experts == 2, "FusedExperts kernel supports 2 local experts (top-2)"

    x = hidden_states.reshape(-1, d_in)
    n = x.shape[0]

    # coef[..., e] = mask0[..., e]*gate0 + mask1[..., e]*gate1   (cheap glue)
    coef = (masks_se[0] * gates[0][..., None]
            + masks_se[1] * gates[1][..., None]).reshape(-1, 2).astype(jnp.float32)
    c0 = coef[:, 0:1]
    c1 = coef[:, 1:2]

    # ---- Tiling / padding --------------------------------------------------
    d_out_p = _round_up(d_out, 128)                      # lane-dense output stores
    tm_eff = max(sub, min(tm, _round_up(n, sub)))        # shrink tile for tiny n
    tm_eff = _round_up(tm_eff, sub)
    n_pad = _round_up(n, tm_eff)

    if n_pad != n:
        pad = n_pad - n
        x = jnp.pad(x, ((0, pad), (0, 0)))
        c0 = jnp.pad(c0, ((0, pad), (0, 0)))
        c1 = jnp.pad(c1, ((0, pad), (0, 0)))

    # Fuse both experts into one x @ W^T matmul: (D_in, 2*D_out_p) weight slab.
    w_t = jnp.transpose(weight, (0, 2, 1))                       # (2, D_in, D_out)
    w_t = jnp.pad(w_t, ((0, 0), (0, 0), (0, d_out_p - d_out)))   # (2, D_in, D_out_p)
    w_cat = jnp.transpose(w_t, (1, 0, 2)).reshape(d_in, 2 * d_out_p).astype(cdt)
    b_cat = jnp.pad(bias, ((0, 0), (0, d_out_p - d_out)))
    b_cat = b_cat.reshape(1, 2 * d_out_p).astype(jnp.float32)

    x = x.astype(cdt)

    grid = (n_pad // tm_eff,)
    out = pl.pallas_call(
        _fused_experts_kernel,
        out_shape=jax.ShapeDtypeStruct((n_pad, d_out_p), hidden_states.dtype),
        grid_spec=pltpu.PrefetchScalarGridSpec(
            num_scalar_prefetch=0,
            grid=grid,
            in_specs=[
                pl.BlockSpec((tm_eff, d_in), lambda i: (i, 0)),          # x tile
                pl.BlockSpec((d_in, 2 * d_out_p), lambda i: (0, 0)),     # fused weights (resident)
                pl.BlockSpec((1, 2 * d_out_p), lambda i: (0, 0)),        # fused biases
                pl.BlockSpec((tm_eff, 1), lambda i: (i, 0)),             # expert-0 coefficient
                pl.BlockSpec((tm_eff, 1), lambda i: (i, 0)),             # expert-1 coefficient
            ],
            out_specs=pl.BlockSpec((tm_eff, d_out_p), lambda i: (i, 0)),
        ),
        compiler_params=pltpu.CompilerParams(
            dimension_semantics=("parallel",),   # megacore sharding over token tiles
            vmem_limit_bytes=48 << 20,           # above 16/32 MiB defaults, safe on v7x
        ),
    )(x, w_cat, b_cat, c0, c1)

    return out[:n, :d_out].reshape(*lead_shape, d_out)


def reference_forward(hidden_states, masks_se, gates, weight, bias):
    """Pure-JAX mirror of FusedExperts.top2_expert_forward (torch semantics)."""
    y = jnp.stack(
        [hidden_states @ weight[e].T + bias[e] for e in range(weight.shape[0])],
        axis=-2,
    )  # (..., E, D_out)
    out = ((masks_se[0][..., None] * y).sum(-2) * gates[0][..., None]
           + (masks_se[1][..., None] * y).sum(-2) * gates[1][..., None])
    return out


if __name__ == "__main__":
    # Small shapes consistent with the module: tokens (B, S), d_model -> d_out,
    # num_local_experts = 2, top-2 routing masks/gates per token.
    B, S, D_IN, D_OUT, E = 2, 8, 32, 48, 2

    key = jax.random.PRNGKey(0)
    k_x, k_w, k_b, k_g, k_i = jax.random.split(key, 5)

    x = jax.random.normal(k_x, (B, S, D_IN), dtype=jnp.float32)

    # torch nn.Linear layout: weight (D_OUT, D_IN), bias (D_OUT,) per expert.
    w = jax.random.normal(k_w, (E, D_OUT, D_IN), dtype=jnp.float32) * 0.05
    bias = jax.random.normal(k_b, (E, D_OUT), dtype=jnp.float32) * 0.05

    # Top-2 routing: one-hot masks over the 2 experts + softmax gates per token.
    idx0 = jax.random.randint(k_i, (B, S), 0, E)
    idx1 = (idx0 + 1) % E
    mask0 = jax.nn.one_hot(idx0, E, dtype=jnp.float32)
    mask1 = jax.nn.one_hot(idx1, E, dtype=jnp.float32)
    gate_logits = jax.random.normal(k_g, (B, S, 2), dtype=jnp.float32)
    gate_probs = jax.nn.softmax(gate_logits, axis=-1)
    gate0, gate1 = gate_probs[..., 0], gate_probs[..., 1]

    ref = reference_forward(x, (mask0, mask1), (gate0, gate1), w, bias)

    # f32 compute path: exact check.
    out_f32 = fused_experts_forward(x, (mask0, mask1), (gate0, gate1), w, bias, tm=256)
    out_f32 = jax.block_until_ready(out_f32)
    assert out_f32.shape == (B, S, D_OUT)
    assert jnp.allclose(out_f32, ref, atol=1e-5, rtol=1e-5), "f32 mismatch vs reference"

    # bf16 MXU path (recommended on v5e/v6e/v7x): loose tolerance for the cast.
    out_bf16 = fused_experts_forward(x, (mask0, mask1), (gate0, gate1), w, bias,
                                     tm=256, compute_dtype=jnp.bfloat16)
    out_bf16 = jax.block_until_ready(out_bf16)
    assert jnp.allclose(out_bf16, ref, atol=3e-2, rtol=3e-2), "bf16 mismatch vs reference"

    print("KERNEL_OK")
</pallas_src>

<mosaic_0001>
module attributes {stable_mosaic.version = 11 : i64} {
  func.func @_fused_experts_kernel(%arg0: i32, %arg1: memref<16x32xf32, #tpu.memory_space<vmem>>, %arg2: memref<32x256xf32, #tpu.memory_space<vmem>>, %arg3: memref<1x256xf32, #tpu.memory_space<vmem>>, %arg4: memref<16x1xf32, #tpu.memory_space<vmem>>, %arg5: memref<16x1xf32, #tpu.memory_space<vmem>>, %arg6: memref<16x128xf32, #tpu.memory_space<vmem>>) attributes {dimension_semantics = [#tpu.dimension_semantics<parallel>], iteration_bounds = array<i64: 1>, scalar_prefetch = 0 : i64, scratch_operands = 0 : i64, tpu.core_type = #tpu.core_type<tc>, window_params = [{transform_indices = @transform_0, window_bounds = array<i64: 16, 32>}, {pipeline_mode = #tpu.pipeline_mode<synchronous>, transform_indices = @transform_1, window_bounds = array<i64: 32, 256>}, {pipeline_mode = #tpu.pipeline_mode<synchronous>, transform_indices = @transform_2, window_bounds = array<i64: 1, 256>}, {transform_indices = @transform_3, window_bounds = array<i64: 16, 1>}, {transform_indices = @transform_4, window_bounds = array<i64: 16, 1>}, {transform_indices = @transform_5, window_bounds = array<i64: 16, 128>}]} {
    %c0 = arith.constant 0 : index
    %c0_0 = arith.constant 0 : index
    %0 = vector.load %arg1[%c0, %c0_0] : memref<16x32xf32, #tpu.memory_space<vmem>>, vector<16x32xf32>
    %c0_1 = arith.constant 0 : index
    %c0_2 = arith.constant 0 : index
    %1 = vector.load %arg2[%c0_1, %c0_2] : memref<32x256xf32, #tpu.memory_space<vmem>>, vector<32x256xf32>
    %cst = arith.constant dense<0.000000e+00> : vector<16x256xf32>
    %2 = tpu.matmul %0, %1, %cst {dimension_numbers = #tpu.dot_dimension_numbers<[1], [0], [0], [1], [0, 0, 1, 1], [], []>} : vector<16x32xf32>, vector<32x256xf32>, vector<16x256xf32> -> vector<16x256xf32>
    %c0_3 = arith.constant 0 : index
    %c0_4 = arith.constant 0 : index
    %3 = vector.load %arg3[%c0_3, %c0_4] : memref<1x256xf32, #tpu.memory_space<vmem>>, vector<1x256xf32>
    %4 = vector.broadcast %3 : vector<1x256xf32> to vector<16x256xf32>
    %5 = arith.addf %2, %4 : vector<16x256xf32>
    %6 = vector.extract_strided_slice %5 {offsets = [0, 0], sizes = [16, 128], strides = [1, 1]} : vector<16x256xf32> to vector<16x128xf32>
    %7 = vector.extract_strided_slice %5 {offsets = [0, 128], sizes = [16, 128], strides = [1, 1]} : vector<16x256xf32> to vector<16x128xf32>
    %c0_5 = arith.constant 0 : index
    %c0_6 = arith.constant 0 : index
    %8 = vector.load %arg4[%c0_5, %c0_6] : memref<16x1xf32, #tpu.memory_space<vmem>>, vector<16x1xf32>
    %9 = vector.broadcast %8 : vector<16x1xf32> to vector<16x128xf32>
    %10 = arith.mulf %9, %6 : vector<16x128xf32>
    %c0_7 = arith.constant 0 : index
    %c0_8 = arith.constant 0 : index
    %11 = vector.load %arg5[%c0_7, %c0_8] : memref<16x1xf32, #tpu.memory_space<vmem>>, vector<16x1xf32>
    %12 = vector.broadcast %11 : vector<16x1xf32> to vector<16x128xf32>
    %13 = arith.mulf %12, %7 : vector<16x128xf32>
    %14 = arith.addf %10, %13 : vector<16x128xf32>
    %c0_9 = arith.constant 0 : index
    %c0_10 = arith.constant 0 : index
    %15 = vector.load %arg6[%c0_9, %c0_10] : memref<16x128xf32, #tpu.memory_space<vmem>>, vector<16x128xf32>
    tpu.vector_store %arg6[%c0_9, %c0_10], %14 {strides = array<i32>} : memref<16x128xf32, #tpu.memory_space<vmem>>, vector<16x128xf32>,
    return
  }
  func.func @transform_0(%arg0: i32) -> (i32, i32) {
    %c0_i32 = arith.constant 0 : i32
    %c0_i32_0 = arith.constant 0 : i32
    return %arg0, %c0_i32 : i32, i32
  }
  func.func @transform_1(%arg0: i32) -> (i32, i32) {
    %c0_i32 = arith.constant 0 : i32
    %c0_i32_0 = arith.constant 0 : i32
    %c0_i32_1 = arith.constant 0 : i32
    return %c0_i32, %c0_i32_0 : i32, i32
  }
  func.func @transform_2(%arg0: i32) -> (i32, i32) {
    %c0_i32 = arith.constant 0 : i32
    %c0_i32_0 = arith.constant 0 : i32
    %c0_i32_1 = arith.constant 0 : i32
    return %c0_i32, %c0_i32_0 : i32, i32
  }
  func.func @transform_3(%arg0: i32) -> (i32, i32) {
    %c0_i32 = arith.constant 0 : i32
    %c0_i32_0 = arith.constant 0 : i32
    return %arg0, %c0_i32 : i32, i32
  }
  func.func @transform_4(%arg0: i32) -> (i32, i32) {
    %c0_i32 = arith.constant 0 : i32
    %c0_i32_0 = arith.constant 0 : i32
    return %arg0, %c0_i32 : i32, i32
  }
  func.func @transform_5(%arg0: i32) -> (i32, i32) {
    %c0_i32 = arith.constant 0 : i32
    %c0_i32_0 = arith.constant 0 : i32
    return %arg0, %c0_i32 : i32, i32
  }
}

</mosaic_0001>

<llo_original>
// kernel: fused_experts_forward.1
$region0: #{fused_experts_forward.1}
  #allocation0 [shape = 'u32[]', space=smem, size = 0x4, offset = 0x4, fixed_abs, tag = 'smem constant byte address 0x4 - core index']
  #allocation1 [shape = 'u32[144,128]{1,0:T(1,128)}', space=vmem, size = 0x12000, scoped, tag = 'internal scratch']
  %s0 = inlined_call_operand.vmem [shape: f32[16,32], index: 0, kind: input, shape index: {}]
  %s1 = inlined_call_operand.vmem [shape: f32[32,256], index: 1, kind: input, shape index: {}]
  %s2 = inlined_call_operand.vmem [shape: f32[1,256], index: 2, kind: input, shape index: {}]
  %s3 = inlined_call_operand.vmem [shape: f32[16,1], index: 3, kind: input, shape index: {}]
  %s4 = inlined_call_operand.vmem [shape: f32[16,1], index: 4, kind: input, shape index: {}]
  %s5 = inlined_call_operand.vmem [shape: f32[16,128], index: 5, kind: output, shape index: {}]
  %s6 = sld [smem:[#allocation0]]
  $region30: #{fused_experts_forward.1} parent=0
    _
  %s8 = ssub.s32 1, %s6
  %s9 = scalar_select 0, %s8, %s6
  // Predicated region
  $region2: #{fused_experts_forward.1} parent=0 // pred_check
    _
  $region3: #{fused_experts_forward.1} parent=0 // pred_check_branch
    %11 = sbr.rel (0) target = $region5
  $region4: #{fused_experts_forward.1} parent=0 // pred_region
    _
  $region5: #{fused_experts_forward.1} parent=0 // pred_fallthru
    _
  // Predicated region
  $region6: #{fused_experts_forward.1} parent=0 // pred_check
    _
  $region7: #{fused_experts_forward.1} parent=0 // pred_check_branch
    %13 = sbr.rel (0) target = $region9
  $region8: #{fused_experts_forward.1} parent=0 // pred_region
    _
  $region9: #{fused_experts_forward.1} parent=0 // pred_fallthru
    _
  // Predicated region
  $region10: #{fused_experts_forward.1} parent=0 // pred_check
    _
  $region11: #{fused_experts_forward.1} parent=0 // pred_check_branch
    %15 = sbr.rel (0) target = $region13
  $region12: #{fused_experts_forward.1} parent=0 // pred_region
    _
  $region13: #{fused_experts_forward.1} parent=0 // pred_fallthru
    _
  // Predicated region
  $region14: #{fused_experts_forward.1} parent=0 // pred_check
    _
  $region15: #{fused_experts_forward.1} parent=0 // pred_check_branch
    %17 = sbr.rel (0) target = $region17
  $region16: #{fused_experts_forward.1} parent=0 // pred_region
    _
  $region17: #{fused_experts_forward.1} parent=0 // pred_fallthru
    _
  // Predicated region
  $region18: #{fused_experts_forward.1} parent=0 // pred_check
    _
  $region19: #{fused_experts_forward.1} parent=0 // pred_check_branch
    %19 = sbr.rel (0) target = $region21
  $region20: #{fused_experts_forward.1} parent=0 // pred_region
    _
  $region21: #{fused_experts_forward.1} parent=0 // pred_fallthru
    _
  %v20 = vld [vmem:[%s0] sm:$0xff]
  %v21 = vld [vmem:[%s0 + $0x8] sm:$0xff]
  %v22 = vld [vmem:[%s1] sm:$0xff]
  %v23 = vld [vmem:[%s1 + $0x8] sm:$0xff]
  %v24 = vld [vmem:[%s1 + $0x10] sm:$0xff]
  %v25 = vld [vmem:[%s1 + $0x18] sm:$0xff]
  %v26 = vld [vmem:[%s1 + $0x20] sm:$0xff]
  %v27 = vld [vmem:[%s1 + $0x28] sm:$0xff]
  %v28 = vld [vmem:[%s1 + $0x30] sm:$0xff]
  %v29 = vld [vmem:[%s1 + $0x38] sm:$0xff]
  %v30 = vld [vmem:[%s2] sm:$0x3]
  %v32 = vlaneseq
  %v33 = vshrl.u32 %v32, 7
  %v34 = vsub.s32 0, %v33
  %v35 = vrot.slane %v30, %v34
  %v36 = vlaneseq
  %v37 = vshrl.u32 %v36, 7
  %v38 = vsub.s32 1, %v37
  %v39 = vrot.slane %v30, %v38
  %vm42 = vcmask 261120
  %v44 = vsel %vm42, %v20, 0
  %v47 = vsel %vm42, %v21, 0
  %49 = vmatprep.subr.mxu0 %v23
  %50 = vmatpush1.msra.mxu0 %v22
  %51 = vmatprep.subr.mxu0 %v25
  %52 = vmatpush1.msra.mxu0 %v24
  %53 = vmatprep.subr.mxu0 %v27
  %54 = vmatpush1.msra.mxu0 %v26
  %55 = vmatprep.subr.mxu0 %v29
  %56 = vmatpush1.msra.mxu0 %v28
  %57 = vmatprep.subr.mxu0 0.0
  %58 = vmatpush1.msra.mxu0 0.0
  %59 = vmatprep.subr.mxu0 0.0
  %60 = vmatpush1.msra.mxu0 0.0
  %61 = vmatprep.subr.mxu0 0.0
  %62 = vmatpush1.msra.mxu0 0.0
  %63 = vmatprep.subr.mxu0 0.0
  %64 = vmatpush1.msra.mxu0 0.0
  %65 = vmatprep.subr.mxu0 0.0
  %66 = vmatpush1.msra.mxu0 0.0
  %67 = vmatprep.subr.mxu0 0.0
  %68 = vmatpush1.msra.mxu0 0.0
  %69 = vmatprep.subr.mxu0 0.0
  %70 = vmatpush1.msra.mxu0 0.0
  %71 = vmatprep.subr.mxu0 0.0
  %72 = vmatpush1.msra.mxu0 0.0
  %73 = vmatprep.subr.mxu0 0.0
  %74 = vmatpush1.msra.mxu0 0.0
  %75 = vmatprep.subr.mxu0 0.0
  %76 = vmatpush1.msra.mxu0 0.0
  %77 = vmatprep.subr.mxu0 0.0
  %78 = vmatpush1.msra.mxu0 0.0
  %79 = vmatprep.subr.mxu0 0.0
  %80 = vmatpush1.msra.mxu0 0.0
  %81 = vmatprep.subr.mxu0 0.0
  %82 = vmatpush1.msra.mxu0 0.0
  %83 = vmatprep.subr.mxu0 0.0
  %84 = vmatpush1.msra.mxu0 0.0
  %85 = vmatprep.subr.mxu0 0.0
  %86 = vmatpush1.msra.mxu0 0.0
  %87 = vmatprep.subr.mxu0 0.0
  %88 = vmatpush1.msra.mxu0 0.0
  %89 = vmatprep.subr.mxu0 0.0
  %90 = vmatpush1.msra.mxu0 0.0
  %91 = vmatprep.subr.mxu0 0.0
  %92 = vmatpush1.msra.mxu0 0.0
  %93 = vmatprep.subr.mxu0 0.0
  %94 = vmatpush1.msra.mxu0 0.0
  %95 = vmatprep.subr.mxu0 0.0
  %96 = vmatpush1.msra.mxu0 0.0
  %97 = vmatprep.subr.mxu0 0.0
  %98 = vmatpush1.msra.mxu0 0.0
  %99 = vmatprep.subr.mxu0 0.0
  %100 = vmatpush1.msra.mxu0 0.0
  %101 = vmatprep.subr.mxu0 0.0
  %102 = vmatpush1.msra.mxu0 0.0
  %103 = vmatprep.subr.mxu0 0.0
  %104 = vmatpush1.msra.mxu0 0.0
  %105 = vmatprep.subr.mxu0 0.0
  %106 = vmatpush1.msra.mxu0 0.0
  %107 = vmatprep.subr.mxu0 0.0
  %108 = vmatpush1.msra.mxu0 0.0
  %109 = vmatprep.subr.mxu0 0.0
  %110 = vmatpush1.msra.mxu0 0.0
  %111 = vmatprep.subr.mxu0 0.0
  %112 = vmatpush1.msra.mxu0 0.0
  %113 = vmatprep.mubr.f32.mxu0 0.0
  %114 = vmatmul.mubr.f32.gmra.mrb[0].mxu0 %v44
  %v115 = vpop.f32.mrb[0].mxu0
  %v116 = vadd.f32 %v35, %v115
  %v117 = vpop.f32.mrb[0].mxu0
  %v118 = vadd.f32 %v39, %v117
  %119 = vmatprep.mubr.f32.mxu0 0.0
  %120 = vmatmul.mubr.f32.gmra.mrb[0].mxu0 %v47
  %v121 = vpop.f32.mrb[0].mxu0
  %v122 = vadd.f32 %v35, %v121
  %v123 = vpop.f32.mrb[0].mxu0
  %v124 = vadd.f32 %v39, %v123
  %125 = vdwg.mxu0
  %v126 = vld [vmem:[%s3] sm:$0xff]
  %v127 = vld [vmem:[%s3 + $0x8] sm:$0xff]
  %129 = vset.pattern.permute.xlu0 0
  %130 = vperm.xlu0 %129, %v126
  %v131 = vpop.permute.xlu0 %130
  %134 = vset.pattern.permute.xlu0 0
  %135 = vperm.xlu0 %134, %v127
  %v136 = vpop.permute.xlu0 %135
  %v138 = vmul.f32 %v131, %v116
  %v139 = vmul.f32 %v136, %v122
  %v140 = vld [vmem:[%s4] sm:$0xff]
  %v141 = vld [vmem:[%s4 + $0x8] sm:$0xff]
  %143 = vset.pattern.permute.xlu0 0
  %144 = vperm.xlu0 %143, %v140
  %v145 = vpop.permute.xlu0 %144
  %148 = vset.pattern.permute.xlu0 0
  %149 = vperm.xlu0 %148, %v141
  %v150 = vpop.permute.xlu0 %149
  %v152 = vmul.f32 %v145, %v118
  %v153 = vmul.f32 %v150, %v124
  %v154 = vadd.f32 %v138, %v152
  %v155 = vadd.f32 %v139, %v153
  %156 = vst [vmem:[%s5] sm:$0xff] %v154
  %157 = vst [vmem:[%s5 + $0x8] sm:$0xff] %v155
  // Predicated region
  $region22: #{fused_experts_forward.1} parent=0 // pred_check
    _
  $region23: #{fused_experts_forward.1} parent=0 // pred_check_branch
    %159 = sbr.rel (0) target = $region25
  $region24: #{fused_experts_forward.1} parent=0 // pred_region
    _
  $region25: #{fused_experts_forward.1} parent=0 // pred_fallthru
    _
  // Predicated region
  $region26: #{fused_experts_forward.1} parent=0 // pred_check
    _
  $region27: #{fused_experts_forward.1} parent=0 // pred_check_branch
    %161 = sbr.rel (0) target = $region29
  $region28: #{fused_experts_forward.1} parent=0 // pred_region
    _
  $region29: #{fused_experts_forward.1} parent=0 // pred_fallthru
    _

</llo_original>
